<compile_context>
chip_gen: v7x
topology: tpu7x:2x2x1
jax: 0.10.0
libtpu: 0.0.40
codegen_flags: <defaults>
</compile_context>

<pallas_src>
import functools

import jax
import jax.numpy as jnp
from jax.experimental import pallas as pl
from jax.experimental.pallas import tpu as pltpu

_LANE = 128


def _round_up(x, m):
    return (x + m - 1) // m * m


# ---------------------------------------------------------------------------
# Pallas kernels: MXU matmul (f32 accumulation) + folded-BN bias (+res) + ReLU
# ---------------------------------------------------------------------------
def _matmul_bias_relu_kernel(p_ref, w_ref, b_ref, o_ref):
    # p_ref: [TM, K] bf16 im2col patches   w_ref: [K, TN] bf16 (BN-scaled)
    # b_ref: [1, TN] f32 folded bias       o_ref: [TM, TN]
    acc = jnp.dot(p_ref[...], w_ref[...], preferred_element_type=jnp.float32)
    o_ref[...] = jnp.maximum(acc + b_ref[...], 0.0).astype(o_ref.dtype)


def _matmul_bias_add_relu_kernel(p_ref, w_ref, b_ref, sc_ref, o_ref):
    # Same as above + fused residual add before the ReLU.
    acc = jnp.dot(p_ref[...], w_ref[...], preferred_element_type=jnp.float32)
    acc = acc + b_ref[...] + sc_ref[...].astype(jnp.float32)
    o_ref[...] = jnp.maximum(acc, 0.0).astype(o_ref.dtype)


# ---------------------------------------------------------------------------
# Plain-JAX glue
# ---------------------------------------------------------------------------
def _extract_patches(x_nhwc, *, kh=3, kw=3, stride=1, pad=1):
    """im2col: [N,H,W,C] -> [N,Ho,Wo, kh*kw*C] (channel fastest within a tap)."""
    n, h, w, c = x_nhwc.shape
    xp = jnp.pad(x_nhwc, ((0, 0), (pad, pad), (pad, pad), (0, 0)))
    ho = (h + 2 * pad - kh) // stride + 1
    wo = (w + 2 * pad - kw) // stride + 1
    taps = []
    for i in range(kh):
        for j in range(kw):
            taps.append(
                xp[:, i:i + stride * ho:stride, j:j + stride * wo:stride, :])
    return jnp.concatenate(taps, axis=-1)  # [N, Ho, Wo, kh*kw*C]


def _fused_conv_bn(x_nhwc, w_mat, bias, *, stride, shortcut=None,
                   out_dtype=jnp.bfloat16, tm_max=1024, tn=_LANE):
    """conv3x3(pad=1) + folded BN (+ residual add) + ReLU, tiled over (M, Co)."""
    patches = _extract_patches(x_nhwc.astype(jnp.bfloat16), stride=stride)
    n, ho, wo, k = patches.shape
    co_pad = w_mat.shape[1]          # already zero-padded to a multiple of 128
    m = n * ho * wo

    # Tile sizes: TM multiple of 8 (capped), TN = 128 lanes.
    tm = max(8, min(tm_max, _round_up(m, 8)))
    m_pad = _round_up(m, tm)
    grid = (m_pad // tm, co_pad // tn)

    p2d = patches.reshape(m, k)
    if m_pad != m:
        p2d = jnp.pad(p2d, ((0, m_pad - m), (0, 0)))

    args = [p2d,
            w_mat.astype(jnp.bfloat16),
            bias.reshape(1, co_pad).astype(jnp.float32)]
    in_specs = [
        pl.BlockSpec((tm, k), lambda i, j: (i, 0)),   # patches, streamed over M
        pl.BlockSpec((k, tn), lambda i, j: (0, j)),   # weight slab per TN
        pl.BlockSpec((1, tn), lambda i, j: (0, j)),   # folded bias, tiny
    ]
    out_bytes = m_pad * co_pad * jnp.dtype(out_dtype).itemsize
    bytes_accessed = (m_pad * k * 2 * (co_pad // tn) + k * co_pad * 2
                      + co_pad * 4 + out_bytes)

    if shortcut is None:
        kernel = _matmul_bias_relu_kernel
    else:
        kernel = _matmul_bias_add_relu_kernel
        sc2d = shortcut.reshape(m, co_pad).astype(jnp.bfloat16)
        if m_pad != m:
            sc2d = jnp.pad(sc2d, ((0, m_pad - m), (0, 0)))
        args.append(sc2d)
        in_specs.append(pl.BlockSpec((tm, tn), lambda i, j: (i, j)))
        bytes_accessed += m_pad * co_pad * 2

    out = pl.pallas_call(
        kernel,
        out_shape=jax.ShapeDtypeStruct((m_pad, co_pad), out_dtype),
        grid=grid,
        in_specs=in_specs,
        out_specs=pl.BlockSpec((tm, tn), lambda i, j: (i, j)),
        compiler_params=pltpu.CompilerParams(
            dimension_semantics=("parallel", "parallel"),
            vmem_limit_bytes=32 * 1024 * 1024),
        cost_estimate=pl.CostEstimate(
            flops=2 * m_pad * k * co_pad,
            transcendentals=0,
            bytes_accessed=int(bytes_accessed)),
    )(*args)
    return out[:m].reshape(n, ho, wo, co_pad)


def _shortcut_option_a(x_nhwc, planes):
    """F.pad(x[:, :, ::2, ::2], (0,0,0,0, planes//4, planes//4)) in NHWC."""
    # NOTE: mirrors the PyTorch lambda; it always subsamples ::2 whenever the
    # shortcut is non-identity (standard CIFAR ResNet has stride==2 here).
    y = x_nhwc[:, ::2, ::2, :]
    p = planes // 4
    return jnp.pad(y, ((0, 0), (0, 0), (0, 0), (p, p)))


def basic_block_forward(x_nchw, params, *, in_planes, planes, stride):
    co_pad = params["w1"].shape[1]
    x = jnp.transpose(x_nchw, (0, 2, 3, 1))                     # NCHW -> NHWC

    # conv1 -> bn1 -> relu  (bf16 intermediate; padded lanes sliced off)
    out1 = _fused_conv_bn(x, params["w1"], params["b1"], stride=stride,
                          out_dtype=jnp.bfloat16)[..., :planes]

    # shortcut (option A)
    if stride != 1 or in_planes != planes:
        sc = _shortcut_option_a(x, planes)
    else:
        sc = x
    sc = jnp.pad(sc, ((0, 0), (0, 0), (0, 0), (0, co_pad - sc.shape[-1])))

    # conv2 -> bn2 -> (+ shortcut) -> relu
    out = _fused_conv_bn(out1, params["w2"], params["b2"], stride=1,
                         shortcut=sc, out_dtype=jnp.float32)[..., :planes]
    return jnp.transpose(out, (0, 3, 1, 2))                     # NHWC -> NCHW


# ---------------------------------------------------------------------------
# Deterministic parameter init + BN folding (scale folded into the weights)
# ---------------------------------------------------------------------------
def _fold_bn(gamma, beta, mean, var, eps=1e-5):
    scale = gamma / jnp.sqrt(var + eps)
    bias = beta - mean * scale
    return scale, bias


def make_params(key, in_planes, planes):
    co_pad = _round_up(planes, _LANE)
    k1, k2 = jax.random.split(key)
    # weights laid out [KH, KW, C_in, C_out]
    w1 = 0.1 * jax.random.normal(k1, (3, 3, in_planes, planes), jnp.float32)
    w2 = 0.1 * jax.random.normal(k2, (3, 3, planes, planes), jnp.float32)

    g1 = jnp.linspace(0.9, 1.1, planes, dtype=jnp.float32)
    be1 = jnp.linspace(-0.1, 0.1, planes, dtype=jnp.float32)
    m1 = jnp.linspace(-0.05, 0.05, planes, dtype=jnp.float32)
    v1 = jnp.linspace(0.9, 1.2, planes, dtype=jnp.float32)
    s1, b1 = _fold_bn(g1, be1, m1, v1)

    g2 = jnp.linspace(1.05, 0.95, planes, dtype=jnp.float32)
    be2 = jnp.linspace(0.1, -0.1, planes, dtype=jnp.float32)
    m2 = jnp.linspace(0.02, -0.02, planes, dtype=jnp.float32)
    v2 = jnp.linspace(1.1, 0.95, planes, dtype=jnp.float32)
    s2, b2 = _fold_bn(g2, be2, m2, v2)

    def pack(w_hwio, scale, bias, cin):
        # fold BN scale into the weight matrix; zero-pad Co up to 128 lanes
        w_mat = w_hwio.reshape(3 * 3 * cin, planes) * scale[None, :]
        w_mat = jnp.pad(w_mat, ((0, 0), (0, co_pad - planes)))
        b_pad = jnp.pad(bias, (0, co_pad - planes))
        return w_mat, b_pad

    w1_mat, b1_pad = pack(w1, s1, b1, in_planes)
    w2_mat, b2_pad = pack(w2, s2, b2, planes)

    return {
        "w1": w1_mat, "b1": b1_pad,
        "w2": w2_mat, "b2": b2_pad,
        # unfolded copies for the pure-JAX reference check
        "w1_hwio": w1, "w2_hwio": w2,
        "s1": s1, "bb1": b1, "s2": s2, "bb2": b2,
    }


# ---------------------------------------------------------------------------
# Pure-JAX reference (correctness check only)
# ---------------------------------------------------------------------------
def _ref_forward(x_nchw, params, *, in_planes, planes, stride):
    x = jnp.transpose(x_nchw, (0, 2, 3, 1)).astype(jnp.float32)
    dn = ("NHWC", "HWIO", "NHWC")

    def conv(inp, w, s):
        return jax.lax.conv_general_dilated(
            inp, w, window_strides=(s, s), padding=((1, 1), (1, 1)),
            dimension_numbers=dn)

    out = jnp.maximum(conv(x, params["w1_hwio"], stride) * params["s1"]
                      + params["bb1"], 0.0)
    out = conv(out, params["w2_hwio"], 1) * params["s2"] + params["bb2"]
    if stride != 1 or in_planes != planes:
        sc = _shortcut_option_a(x, planes)
    else:
        sc = x
    out = jnp.maximum(out + sc, 0.0)
    return jnp.transpose(out, (0, 3, 1, 2))


# ---------------------------------------------------------------------------
if __name__ == "__main__":
    in_planes, planes, stride = 4, 8, 2
    key = jax.random.PRNGKey(0)
    kx, kp = jax.random.split(key)

    x = jax.random.normal(kx, (2, in_planes, 16, 16), jnp.float32)  # NCHW
    params = make_params(kp, in_planes, planes)

    fwd = jax.jit(functools.partial(
        basic_block_forward, in_planes=in_planes, planes=planes, stride=stride))
    out = jax.block_until_ready(fwd(x, params))

    ref = _ref_forward(x, params, in_planes=in_planes, planes=planes,
                       stride=stride)
    assert out.shape == (2, planes, 8, 8), out.shape
    # bf16 operands with f32 accumulation -> looser tolerance than pure f32
    assert jnp.allclose(out, ref, atol=5e-2, rtol=5e-2), \
        float(jnp.max(jnp.abs(out - ref)))

    print("KERNEL_OK")
</pallas_src>

<mosaic_0001>
module attributes {stable_mosaic.version = 11 : i64} {
  func.func @_matmul_bias_relu_kernel(%arg0: i32, %arg1: i32, %arg2: memref<128x36xbf16, #tpu.memory_space<vmem>>, %arg3: memref<36x128xbf16, #tpu.memory_space<vmem>>, %arg4: memref<1x128xf32, #tpu.memory_space<vmem>>, %arg5: memref<128x128xbf16, #tpu.memory_space<vmem>>) attributes {dimension_semantics = [#tpu.dimension_semantics<parallel>, #tpu.dimension_semantics<parallel>], iteration_bounds = array<i64: 1, 1>, scalar_prefetch = 0 : i64, scratch_operands = 0 : i64, tpu.core_type = #tpu.core_type<tc>, window_params = [{transform_indices = @transform_0, window_bounds = array<i64: 128, 36>}, {transform_indices = @transform_1, window_bounds = array<i64: 36, 128>}, {transform_indices = @transform_2, window_bounds = array<i64: 1, 128>}, {transform_indices = @transform_3, window_bounds = array<i64: 128, 128>}]} {
    %c0 = arith.constant 0 : index
    %c0_0 = arith.constant 0 : index
    %0 = vector.load %arg2[%c0, %c0_0] : memref<128x36xbf16, #tpu.memory_space<vmem>>, vector<128x36xbf16>
    %c0_1 = arith.constant 0 : index
    %c0_2 = arith.constant 0 : index
    %1 = vector.load %arg3[%c0_1, %c0_2] : memref<36x128xbf16, #tpu.memory_space<vmem>>, vector<36x128xbf16>
    %cst = arith.constant dense<0.000000e+00> : vector<128x128xf32>
    %2 = tpu.matmul %0, %1, %cst {dimension_numbers = #tpu.dot_dimension_numbers<[1], [0], [0], [1], [0, 0, 1, 1], [], []>} : vector<128x36xbf16>, vector<36x128xbf16>, vector<128x128xf32> -> vector<128x128xf32>
    %c0_3 = arith.constant 0 : index
    %c0_4 = arith.constant 0 : index
    %3 = vector.load %arg4[%c0_3, %c0_4] : memref<1x128xf32, #tpu.memory_space<vmem>>, vector<1x128xf32>
    %4 = vector.broadcast %3 : vector<1x128xf32> to vector<128x128xf32>
    %5 = arith.addf %2, %4 : vector<128x128xf32>
    %cst_5 = arith.constant 0.000000e+00 : f32
    %6 = vector.broadcast %cst_5 : f32 to vector<128x128xf32>
    %7 = arith.maximumf %5, %6 : vector<128x128xf32>
    %8 = arith.truncf %7 : vector<128x128xf32> to vector<128x128xbf16>
    %c0_6 = arith.constant 0 : index
    %c0_7 = arith.constant 0 : index
    %9 = vector.load %arg5[%c0_6, %c0_7] : memref<128x128xbf16, #tpu.memory_space<vmem>>, vector<128x128xbf16>
    tpu.vector_store %arg5[%c0_6, %c0_7], %8 {strides = array<i32>} : memref<128x128xbf16, #tpu.memory_space<vmem>>, vector<128x128xbf16>,
    return
  }
  func.func @transform_0(%arg0: i32, %arg1: i32) -> (i32, i32) {
    %c0_i32 = arith.constant 0 : i32
    %c0_i32_0 = arith.constant 0 : i32
    return %arg0, %c0_i32 : i32, i32
  }
  func.func @transform_1(%arg0: i32, %arg1: i32) -> (i32, i32) {
    %c0_i32 = arith.constant 0 : i32
    %c0_i32_0 = arith.constant 0 : i32
    return %c0_i32, %arg1 : i32, i32
  }
  func.func @transform_2(%arg0: i32, %arg1: i32) -> (i32, i32) {
    %c0_i32 = arith.constant 0 : i32
    %c0_i32_0 = arith.constant 0 : i32
    return %c0_i32, %arg1 : i32, i32
  }
  func.func @transform_3(%arg0: i32, %arg1: i32) -> (i32, i32) {
    %c0_i32 = arith.constant 0 : i32
    return %arg0, %arg1 : i32, i32
  }
}

module attributes {stable_mosaic.version = 11 : i64} {
  func.func @_matmul_bias_add_relu_kernel(%arg0: i32, %arg1: i32, %arg2: memref<128x72xbf16, #tpu.memory_space<vmem>>, %arg3: memref<72x128xbf16, #tpu.memory_space<vmem>>, %arg4: memref<1x128xf32, #tpu.memory_space<vmem>>, %arg5: memref<128x128xbf16, #tpu.memory_space<vmem>>, %arg6: memref<128x128xf32, #tpu.memory_space<vmem>>) attributes {dimension_semantics = [#tpu.dimension_semantics<parallel>, #tpu.dimension_semantics<parallel>], iteration_bounds = array<i64: 1, 1>, scalar_prefetch = 0 : i64, scratch_operands = 0 : i64, tpu.core_type = #tpu.core_type<tc>, window_params = [{transform_indices = @transform_0, window_bounds = array<i64: 128, 72>}, {transform_indices = @transform_1, window_bounds = array<i64: 72, 128>}, {transform_indices = @transform_2, window_bounds = array<i64: 1, 128>}, {transform_indices = @transform_3, window_bounds = array<i64: 128, 128>}, {transform_indices = @transform_4, window_bounds = array<i64: 128, 128>}]} {
    %c0 = arith.constant 0 : index
    %c0_0 = arith.constant 0 : index
    %0 = vector.load %arg2[%c0, %c0_0] : memref<128x72xbf16, #tpu.memory_space<vmem>>, vector<128x72xbf16>
    %c0_1 = arith.constant 0 : index
    %c0_2 = arith.constant 0 : index
    %1 = vector.load %arg3[%c0_1, %c0_2] : memref<72x128xbf16, #tpu.memory_space<vmem>>, vector<72x128xbf16>
    %cst = arith.constant dense<0.000000e+00> : vector<128x128xf32>
    %2 = tpu.matmul %0, %1, %cst {dimension_numbers = #tpu.dot_dimension_numbers<[1], [0], [0], [1], [0, 0, 1, 1], [], []>} : vector<128x72xbf16>, vector<72x128xbf16>, vector<128x128xf32> -> vector<128x128xf32>
    %c0_3 = arith.constant 0 : index
    %c0_4 = arith.constant 0 : index
    %3 = vector.load %arg4[%c0_3, %c0_4] : memref<1x128xf32, #tpu.memory_space<vmem>>, vector<1x128xf32>
    %4 = vector.broadcast %3 : vector<1x128xf32> to vector<128x128xf32>
    %5 = arith.addf %2, %4 : vector<128x128xf32>
    %c0_5 = arith.constant 0 : index
    %c0_6 = arith.constant 0 : index
    %6 = vector.load %arg5[%c0_5, %c0_6] : memref<128x128xbf16, #tpu.memory_space<vmem>>, vector<128x128xbf16>
    %7 = arith.extf %6 : vector<128x128xbf16> to vector<128x128xf32>
    %8 = arith.addf %5, %7 : vector<128x128xf32>
    %cst_7 = arith.constant 0.000000e+00 : f32
    %9 = vector.broadcast %cst_7 : f32 to vector<128x128xf32>
    %10 = arith.maximumf %8, %9 : vector<128x128xf32>
    %c0_8 = arith.constant 0 : index
    %c0_9 = arith.constant 0 : index
    %11 = vector.load %arg6[%c0_8, %c0_9] : memref<128x128xf32, #tpu.memory_space<vmem>>, vector<128x128xf32>
    tpu.vector_store %arg6[%c0_8, %c0_9], %10 {strides = array<i32>} : memref<128x128xf32, #tpu.memory_space<vmem>>, vector<128x128xf32>,
    return
  }
  func.func @transform_0(%arg0: i32, %arg1: i32) -> (i32, i32) {
    %c0_i32 = arith.constant 0 : i32
    %c0_i32_0 = arith.constant 0 : i32
    return %arg0, %c0_i32 : i32, i32
  }
  func.func @transform_1(%arg0: i32, %arg1: i32) -> (i32, i32) {
    %c0_i32 = arith.constant 0 : i32
    %c0_i32_0 = arith.constant 0 : i32
    return %c0_i32, %arg1 : i32, i32
  }
  func.func @transform_2(%arg0: i32, %arg1: i32) -> (i32, i32) {
    %c0_i32 = arith.constant 0 : i32
    %c0_i32_0 = arith.constant 0 : i32
    return %c0_i32, %arg1 : i32, i32
  }
  func.func @transform_3(%arg0: i32, %arg1: i32) -> (i32, i32) {
    %c0_i32 = arith.constant 0 : i32
    return %arg0, %arg1 : i32, i32
  }
  func.func @transform_4(%arg0: i32, %arg1: i32) -> (i32, i32) {
    %c0_i32 = arith.constant 0 : i32
    return %arg0, %arg1 : i32, i32
  }
}

</mosaic_0001>

<llo_original>
// kernel: basic_block_forward.2
$region0: #{basic_block_forward.2}
  #allocation0 [shape = 'u32[]', space=smem, size = 0x4, offset = 0x4, fixed_abs, tag = 'smem constant byte address 0x4 - core index']
  #allocation1 [shape = 'u32[144,128]{1,0:T(1,128)}', space=vmem, size = 0x12000, scoped, tag = 'internal scratch']
  %s0 = inlined_call_operand.vmem [shape: bf16[128,36], index: 0, kind: input, shape index: {}]
  %s1 = inlined_call_operand.vmem [shape: bf16[36,128], index: 1, kind: input, shape index: {}]
  %s2 = inlined_call_operand.vmem [shape: f32[1,128], index: 2, kind: input, shape index: {}]
  %s3 = inlined_call_operand.vmem [shape: bf16[128,128], index: 3, kind: output, shape index: {}]
  %s4 = sld [smem:[#allocation0]]
  $region22: #{basic_block_forward.2} parent=0
    _
  %s6 = ssub.s32 1, %s4
  %s7 = scalar_select 0, %s6, %s4
  // Predicated region
  $region2: #{basic_block_forward.2} parent=0 // pred_check
    _
  $region3: #{basic_block_forward.2} parent=0 // pred_check_branch
    %9 = sbr.rel (0) target = $region5
  $region4: #{basic_block_forward.2} parent=0 // pred_region
    _
  $region5: #{basic_block_forward.2} parent=0 // pred_fallthru
    _
  // Predicated region
  $region6: #{basic_block_forward.2} parent=0 // pred_check
    _
  $region7: #{basic_block_forward.2} parent=0 // pred_check_branch
    %11 = sbr.rel (0) target = $region9
  $region8: #{basic_block_forward.2} parent=0 // pred_region
    _
  $region9: #{basic_block_forward.2} parent=0 // pred_fallthru
    _
  // Predicated region
  $region10: #{basic_block_forward.2} parent=0 // pred_check
    _
  $region11: #{basic_block_forward.2} parent=0 // pred_check_branch
    %13 = sbr.rel (0) target = $region13
  $region12: #{basic_block_forward.2} parent=0 // pred_region
    _
  $region13: #{basic_block_forward.2} parent=0 // pred_fallthru
    _
  %v15 = vld [vmem:[%s0] sm:$0xf]
  %v16 = vld [vmem:[%s0 + $0x4] sm:$0xf]
  %v17 = vld [vmem:[%s0 + $0x8] sm:$0xf]
  %v18 = vld [vmem:[%s0 + $0xc] sm:$0xf]
  %v19 = vld [vmem:[%s0 + $0x10] sm:$0xf]
  %v20 = vld [vmem:[%s0 + $0x14] sm:$0xf]
  %v21 = vld [vmem:[%s0 + $0x18] sm:$0xf]
  %v22 = vld [vmem:[%s0 + $0x1c] sm:$0xf]
  %v23 = vld [vmem:[%s0 + $0x20] sm:$0xf]
  %v24 = vld [vmem:[%s0 + $0x24] sm:$0xf]
  %v25 = vld [vmem:[%s0 + $0x28] sm:$0xf]
  %v26 = vld [vmem:[%s0 + $0x2c] sm:$0xf]
  %v27 = vld [vmem:[%s0 + $0x30] sm:$0xf]
  %v28 = vld [vmem:[%s0 + $0x34] sm:$0xf]
  %v29 = vld [vmem:[%s0 + $0x38] sm:$0xf]
  %v30 = vld [vmem:[%s0 + $0x3c] sm:$0xf]
  %v31 = vld [vmem:[%s1] sm:$0xf]
  %v32 = vld [vmem:[%s1 + $0x4] sm:$0xf]
  %v33 = vld [vmem:[%s1 + $0x8] sm:$0xf]
  %v34 = vld [vmem:[%s1 + $0xc] sm:$0xf]
  %v35 = vld [vmem:[%s1 + $0x10] sm:$0x3]
  %v36 = vld [vmem:[%s2] sm:$0x1]
  %v38 = vlaneseq
  %v39 = vshrl.u32 %v38, 7
  %v40 = vsub.s32 0, %v39
  %v41 = vrot.slane %v36, %v40
  %v59 = vunpack.c.l.b16 %v15
  %v60 = vunpack.c.l.b16 %v16
  %v61 = vunpack.c.l.b16 %v17
  %v62 = vunpack.c.l.b16 %v18
  %v63 = vunpack.c.l.b16 %v19
  %v64 = vunpack.c.l.b16 %v20
  %v65 = vunpack.c.l.b16 %v21
  %v66 = vunpack.c.l.b16 %v22
  %v67 = vunpack.c.l.b16 %v23
  %v68 = vunpack.c.l.b16 %v24
  %v69 = vunpack.c.l.b16 %v25
  %v70 = vunpack.c.l.b16 %v26
  %v71 = vunpack.c.l.b16 %v27
  %v72 = vunpack.c.l.b16 %v28
  %v73 = vunpack.c.l.b16 %v29
  %v74 = vunpack.c.l.b16 %v30
  %v75 = vpack.c.b16 %v60, %v59
  %v76 = vpack.c.b16 %v62, %v61
  %v77 = vpack.c.b16 %v64, %v63
  %v78 = vpack.c.b16 %v66, %v65
  %v79 = vpack.c.b16 %v68, %v67
  %v80 = vpack.c.b16 %v70, %v69
  %v81 = vpack.c.b16 %v72, %v71
  %v82 = vpack.c.b16 %v74, %v73
  %v88 = vunpack.c.l.b16 %v31
  %v89 = vunpack.c.l.b16 %v32
  %v90 = vunpack.c.l.b16 %v33
  %v91 = vunpack.c.l.b16 %v34
  %v92 = vunpack.c.l.b16 %v35
  %v93 = vpack.c.b16 %v89, %v88
  %v94 = vpack.c.b16 %v91, %v90
  %v95 = vpack.c.b16 %v92, %v92
  %vm98 = vcmask 293888
  %v100 = vsel %vm98, %v75, 0
  %v103 = vsel %vm98, %v76, 0
  %v106 = vsel %vm98, %v77, 0
  %v109 = vsel %vm98, %v78, 0
  %v112 = vsel %vm98, %v79, 0
  %v115 = vsel %vm98, %v80, 0
  %v118 = vsel %vm98, %v81, 0
  %v121 = vsel %vm98, %v82, 0
  %vm123 = vcmask 1041408
  %v125 = vsel %vm123, %v95, 0
  %127 = vmatprep.subr.bf16.mxu0 0
  %128 = vmatpush1.bf16.msra.mxu0 %v93
  %129 = vmatprep.subr.bf16.mxu0 0
  %130 = vmatpush1.bf16.msra.mxu0 %v94
  %131 = vmatprep.subr.bf16.mxu0 0
  %132 = vmatpush1.bf16.msra.mxu0 %v125
  %133 = vmatprep.subr.bf16.mxu0 0
  %134 = vmatpush1.bf16.msra.mxu0 0
  %135 = vmatprep.subr.bf16.mxu0 0
  %136 = vmatpush1.bf16.msra.mxu0 0
  %137 = vmatprep.subr.bf16.mxu0 0
  %138 = vmatpush1.bf16.msra.mxu0 0
  %139 = vmatprep.subr.bf16.mxu0 0
  %140 = vmatpush1.bf16.msra.mxu0 0
  %141 = vmatprep.subr.bf16.mxu0 0
  %142 = vmatpush1.bf16.msra.mxu0 0
  %143 = vmatprep.subr.bf16.mxu0 0
  %144 = vmatpush1.bf16.msra.mxu0 0
  %145 = vmatprep.subr.bf16.mxu0 0
  %146 = vmatpush1.bf16.msra.mxu0 0
  %147 = vmatprep.subr.bf16.mxu0 0
  %148 = vmatpush1.bf16.msra.mxu0 0
  %149 = vmatprep.subr.bf16.mxu0 0
  %150 = vmatpush1.bf16.msra.mxu0 0
  %151 = vmatprep.subr.bf16.mxu0 0
  %152 = vmatpush1.bf16.msra.mxu0 0
  %153 = vmatprep.subr.bf16.mxu0 0
  %154 = vmatpush1.bf16.msra.mxu0 0
  %155 = vmatprep.subr.bf16.mxu0 0
  %156 = vmatpush1.bf16.msra.mxu0 0
  %157 = vmatprep.subr.bf16.mxu0 0
  %158 = vmatpush1.bf16.msra.mxu0 0
  %159 = vmatprep.mubr.bf16.mxu0 0
  %160 = vmatmul.mubr.bf16.gmra.mrb[0].mxu0 %v100
  %v161 = vpop.f32.mrb[0].mxu0
  %v162 = vadd.f32 %v41, %v161
  %v163 = vpop.f32.mrb[0].mxu0
  %v164 = vpop.f32.mrb[0].mxu0
  %v165 = vadd.f32 %v41, %v164
  %v166 = vpop.f32.mrb[0].mxu0
  %167 = vmatprep.mubr.bf16.mxu0 0
  %168 = vmatmul.mubr.bf16.gmra.mrb[0].mxu0 %v103
  %v169 = vpop.f32.mrb[0].mxu0
  %v170 = vadd.f32 %v41, %v169
  %v171 = vpop.f32.mrb[0].mxu0
  %v172 = vpop.f32.mrb[0].mxu0
  %v173 = vadd.f32 %v41, %v172
  %v174 = vpop.f32.mrb[0].mxu0
  %175 = vmatprep.mubr.bf16.mxu0 0
  %176 = vmatmul.mubr.bf16.gmra.mrb[0].mxu0 %v106
  %v177 = vpop.f32.mrb[0].mxu0
  %v178 = vadd.f32 %v41, %v177
  %v179 = vpop.f32.mrb[0].mxu0
  %v180 = vpop.f32.mrb[0].mxu0
  %v181 = vadd.f32 %v41, %v180
  %v182 = vpop.f32.mrb[0].mxu0
  %183 = vmatprep.mubr.bf16.mxu0 0
  %184 = vmatmul.mubr.bf16.gmra.mrb[0].mxu0 %v109
  %v185 = vpop.f32.mrb[0].mxu0
  %v186 = vadd.f32 %v41, %v185
  %v187 = vpop.f32.mrb[0].mxu0
  %v188 = vpop.f32.mrb[0].mxu0
  %v189 = vadd.f32 %v41, %v188
  %v190 = vpop.f32.mrb[0].mxu0
  %191 = vmatprep.mubr.bf16.mxu0 0
  %192 = vmatmul.mubr.bf16.gmra.mrb[0].mxu0 %v112
  %v193 = vpop.f32.mrb[0].mxu0
  %v194 = vadd.f32 %v41, %v193
  %v195 = vpop.f32.mrb[0].mxu0
  %v196 = vpop.f32.mrb[0].mxu0
  %v197 = vadd.f32 %v41, %v196
  %v198 = vpop.f32.mrb[0].mxu0
  %199 = vmatprep.mubr.bf16.mxu0 0
  %200 = vmatmul.mubr.bf16.gmra.mrb[0].mxu0 %v115
  %v201 = vpop.f32.mrb[0].mxu0
  %v202 = vadd.f32 %v41, %v201
  %v203 = vpop.f32.mrb[0].mxu0
  %v204 = vpop.f32.mrb[0].mxu0
  %v205 = vadd.f32 %v41, %v204
  %v206 = vpop.f32.mrb[0].mxu0
  %207 = vmatprep.mubr.bf16.mxu0 0
  %208 = vmatmul.mubr.bf16.gmra.mrb[0].mxu0 %v118
  %v209 = vpop.f32.mrb[0].mxu0
  %v210 = vadd.f32 %v41, %v209
  %v211 = vpop.f32.mrb[0].mxu0
  %v212 = vpop.f32.mrb[0].mxu0
  %v213 = vadd.f32 %v41, %v212
  %v214 = vpop.f32.mrb[0].mxu0
  %215 = vmatprep.mubr.bf16.mxu0 0
  %216 = vmatmul.mubr.bf16.gmra.mrb[0].mxu0 %v121
  %v217 = vpop.f32.mrb[0].mxu0
  %v218 = vadd.f32 %v41, %v217
  %v219 = vpop.f32.mrb[0].mxu0
  %v220 = vpop.f32.mrb[0].mxu0
  %v221 = vadd.f32 %v41, %v220
  %v222 = vpop.f32.mrb[0].mxu0
  %223 = vdwg.mxu0
  %v224 = vmax.f32 %v162, 0.0
  %v225 = vmax.f32 %v165, 0.0
  %v226 = vmax.f32 %v170, 0.0
  %v227 = vmax.f32 %v173, 0.0
  %v228 = vmax.f32 %v178, 0.0
  %v229 = vmax.f32 %v181, 0.0
  %v230 = vmax.f32 %v186, 0.0
  %v231 = vmax.f32 %v189, 0.0
  %v232 = vmax.f32 %v194, 0.0
  %v233 = vmax.f32 %v197, 0.0
  %v234 = vmax.f32 %v202, 0.0
  %v235 = vmax.f32 %v205, 0.0
  %v236 = vmax.f32 %v210, 0.0
  %v237 = vmax.f32 %v213, 0.0
  %v238 = vmax.f32 %v218, 0.0
  %v239 = vmax.f32 %v221, 0.0
  %v240 = vpack.c.bf16 %v225, %v224
  %v241 = vpack.c.bf16 %v227, %v226
  %v242 = vpack.c.bf16 %v229, %v228
  %v243 = vpack.c.bf16 %v231, %v230
  %v244 = vpack.c.bf16 %v233, %v232
  %v245 = vpack.c.bf16 %v235, %v234
  %v246 = vpack.c.bf16 %v237, %v236
  %v247 = vpack.c.bf16 %v239, %v238
  %v256 = vunpack.c.l.b16 %v240
  %v257 = vunpack.c.h.b16 %v240
  %v258 = vunpack.c.l.b16 %v241
  %v259 = vunpack.c.h.b16 %v241
  %v260 = vunpack.c.l.b16 %v242
  %v261 = vunpack.c.h.b16 %v242
  %v262 = vunpack.c.l.b16 %v243
  %v263 = vunpack.c.h.b16 %v243
  %v264 = vunpack.c.l.b16 %v244
  %v265 = vunpack.c.h.b16 %v244
  %v266 = vunpack.c.l.b16 %v245
  %v267 = vunpack.c.h.b16 %v245
  %v268 = vunpack.c.l.b16 %v246
  %v269 = vunpack.c.h.b16 %v246
  %v270 = vunpack.c.l.b16 %v247
  %v271 = vunpack.c.h.b16 %v247
  %v272 = vpack.c.b16 %v256, %v256
  %v273 = vpack.c.b16 %v257, %v257
  %v274 = vpack.c.b16 %v258, %v258
  %v275 = vpack.c.b16 %v259, %v259
  %v276 = vpack.c.b16 %v260, %v260
  %v277 = vpack.c.b16 %v261, %v261
  %v278 = vpack.c.b16 %v262, %v262
  %v279 = vpack.c.b16 %v263, %v263
  %v280 = vpack.c.b16 %v264, %v264
  %v281 = vpack.c.b16 %v265, %v265
  %v282 = vpack.c.b16 %v266, %v266
  %v283 = vpack.c.b16 %v267, %v267
  %v284 = vpack.c.b16 %v268, %v268
  %v285 = vpack.c.b16 %v269, %v269
  %v286 = vpack.c.b16 %v270, %v270
  %v287 = vpack.c.b16 %v271, %v271
  %304 = vst [vmem:[%s3] sm:$0xf] %v272
  %305 = vst [vmem:[%s3 + $0x4] sm:$0xf] %v273
  %306 = vst [vmem:[%s3 + $0x8] sm:$0xf] %v274
  %307 = vst [vmem:[%s3 + $0xc] sm:$0xf] %v275
  %308 = vst [vmem:[%s3 + $0x10] sm:$0xf] %v276
  %309 = vst [vmem:[%s3 + $0x14] sm:$0xf] %v277
  %310 = vst [vmem:[%s3 + $0x18] sm:$0xf] %v278
  %311 = vst [vmem:[%s3 + $0x1c] sm:$0xf] %v279
  %312 = vst [vmem:[%s3 + $0x20] sm:$0xf] %v280
  %313 = vst [vmem:[%s3 + $0x24] sm:$0xf] %v281
  %314 = vst [vmem:[%s3 + $0x28] sm:$0xf] %v282
  %315 = vst [vmem:[%s3 + $0x2c] sm:$0xf] %v283
  %316 = vst [vmem:[%s3 + $0x30] sm:$0xf] %v284
  %317 = vst [vmem:[%s3 + $0x34] sm:$0xf] %v285
  %318 = vst [vmem:[%s3 + $0x38] sm:$0xf] %v286
  %319 = vst [vmem:[%s3 + $0x3c] sm:$0xf] %v287
  // Predicated region
  $region14: #{basic_block_forward.2} parent=0 // pred_check
    _
  $region15: #{basic_block_forward.2} parent=0 // pred_check_branch
    %321 = sbr.rel (0) target = $region17
  $region16: #{basic_block_forward.2} parent=0 // pred_region
    _
  $region17: #{basic_block_forward.2} parent=0 // pred_fallthru
    _
  // Predicated region
  $region18: #{basic_block_forward.2} parent=0 // pred_check
    _
  $region19: #{basic_block_forward.2} parent=0 // pred_check_branch
    %323 = sbr.rel (0) target = $region21
  $region20: #{basic_block_forward.2} parent=0 // pred_region
    _
  $region21: #{basic_block_forward.2} parent=0 // pred_fallthru
    _

// kernel: basic_block_forward.3
$region0: #{basic_block_forward.3}
  #allocation0 [shape = 'u32[]', space=smem, size = 0x4, offset = 0x4, fixed_abs, tag = 'smem constant byte address 0x4 - core index']
  #allocation1 [shape = 'u32[144,128]{1,0:T(1,128)}', space=vmem, size = 0x12000, scoped, tag = 'internal scratch']
  %s0 = inlined_call_operand.vmem [shape: bf16[128,72], index: 0, kind: input, shape index: {}]
  %s1 = inlined_call_operand.vmem [shape: bf16[72,128], index: 1, kind: input, shape index: {}]
  %s2 = inlined_call_operand.vmem [shape: f32[1,128], index: 2, kind: input, shape index: {}]
  %s3 = inlined_call_operand.vmem [shape: bf16[128,128], index: 3, kind: input, shape index: {}]
  %s4 = inlined_call_operand.vmem [shape: f32[128,128], index: 4, kind: output, shape index: {}]
  %s5 = sld [smem:[#allocation0]]
  $region26: #{basic_block_forward.3} parent=0
    _
  %s7 = ssub.s32 1, %s5
  %s8 = scalar_select 0, %s7, %s5
  // Predicated region
  $region2: #{basic_block_forward.3} parent=0 // pred_check
    _
  $region3: #{basic_block_forward.3} parent=0 // pred_check_branch
    %10 = sbr.rel (0) target = $region5
  $region4: #{basic_block_forward.3} parent=0 // pred_region
    _
  $region5: #{basic_block_forward.3} parent=0 // pred_fallthru
    _
  // Predicated region
  $region6: #{basic_block_forward.3} parent=0 // pred_check
    _
  $region7: #{basic_block_forward.3} parent=0 // pred_check_branch
    %12 = sbr.rel (0) target = $region9
  $region8: #{basic_block_forward.3} parent=0 // pred_region
    _
  $region9: #{basic_block_forward.3} parent=0 // pred_fallthru
    _
  // Predicated region
  $region10: #{basic_block_forward.3} parent=0 // pred_check
    _
  $region11: #{basic_block_forward.3} parent=0 // pred_check_branch
    %14 = sbr.rel (0) target = $region13
  $region12: #{basic_block_forward.3} parent=0 // pred_region
    _
  $region13: #{basic_block_forward.3} parent=0 // pred_fallthru
    _
  // Predicated region
  $region14: #{basic_block_forward.3} parent=0 // pred_check
    _
  $region15: #{basic_block_forward.3} parent=0 // pred_check_branch
    %16 = sbr.rel (0) target = $region17
  $region16: #{basic_block_forward.3} parent=0 // pred_region
    _
  $region17: #{basic_block_forward.3} parent=0 // pred_fallthru
    _
  %v18 = vld [vmem:[%s0] sm:$0xf]
  %v19 = vld [vmem:[%s0 + $0x4] sm:$0xf]
  %v20 = vld [vmem:[%s0 + $0x8] sm:$0xf]
  %v21 = vld [vmem:[%s0 + $0xc] sm:$0xf]
  %v22 = vld [vmem:[%s0 + $0x10] sm:$0xf]
  %v23 = vld [vmem:[%s0 + $0x14] sm:$0xf]
  %v24 = vld [vmem:[%s0 + $0x18] sm:$0xf]
  %v25 = vld [vmem:[%s0 + $0x1c] sm:$0xf]
  %v26 = vld [vmem:[%s0 + $0x20] sm:$0xf]
  %v27 = vld [vmem:[%s0 + $0x24] sm:$0xf]
  %v28 = vld [vmem:[%s0 + $0x28] sm:$0xf]
  %v29 = vld [vmem:[%s0 + $0x2c] sm:$0xf]
  %v30 = vld [vmem:[%s0 + $0x30] sm:$0xf]
  %v31 = vld [vmem:[%s0 + $0x34] sm:$0xf]
  %v32 = vld [vmem:[%s0 + $0x38] sm:$0xf]
  %v33 = vld [vmem:[%s0 + $0x3c] sm:$0xf]
  %v34 = vld [vmem:[%s1] sm:$0xf]
  %v35 = vld [vmem:[%s1 + $0x4] sm:$0xf]
  %v36 = vld [vmem:[%s1 + $0x8] sm:$0xf]
  %v37 = vld [vmem:[%s1 + $0xc] sm:$0xf]
  %v38 = vld [vmem:[%s1 + $0x10] sm:$0xf]
  %v39 = vld [vmem:[%s1 + $0x14] sm:$0xf]
  %v40 = vld [vmem:[%s1 + $0x18] sm:$0xf]
  %v41 = vld [vmem:[%s1 + $0x1c] sm:$0xf]
  %v42 = vld [vmem:[%s1 + $0x20] sm:$0xf]
  %v43 = vld [vmem:[%s2] sm:$0x1]
  %v45 = vlaneseq
  %v46 = vshrl.u32 %v45, 7
  %v47 = vsub.s32 0, %v46
  %v48 = vrot.slane %v43, %v47
  %v66 = vunpack.c.l.b16 %v18
  %v67 = vunpack.c.l.b16 %v19
  %v68 = vunpack.c.l.b16 %v20
  %v69 = vunpack.c.l.b16 %v21
  %v70 = vunpack.c.l.b16 %v22
  %v71 = vunpack.c.l.b16 %v23
  %v72 = vunpack.c.l.b16 %v24
  %v73 = vunpack.c.l.b16 %v25
  %v74 = vunpack.c.l.b16 %v26
  %v75 = vunpack.c.l.b16 %v27
  %v76 = vunpack.c.l.b16 %v28
  %v77 = vunpack.c.l.b16 %v29
  %v78 = vunpack.c.l.b16 %v30
  %v79 = vunpack.c.l.b16 %v31
  %v80 = vunpack.c.l.b16 %v32
  %v81 = vunpack.c.l.b16 %v33
  %v82 = vpack.c.b16 %v67, %v66
  %v83 = vpack.c.b16 %v69, %v68
  %v84 = vpack.c.b16 %v71, %v70
  %v85 = vpack.c.b16 %v73, %v72
  %v86 = vpack.c.b16 %v75, %v74
  %v87 = vpack.c.b16 %v77, %v76
  %v88 = vpack.c.b16 %v79, %v78
  %v89 = vpack.c.b16 %v81, %v80
  %v99 = vunpack.c.l.b16 %v34
  %v100 = vunpack.c.l.b16 %v35
  %v101 = vunpack.c.l.b16 %v36
  %v102 = vunpack.c.l.b16 %v37
  %v103 = vunpack.c.l.b16 %v38
  %v104 = vunpack.c.l.b16 %v39
  %v105 = vunpack.c.l.b16 %v40
  %v106 = vunpack.c.l.b16 %v41
  %v107 = vunpack.c.l.b16 %v42
  %v108 = vpack.c.b16 %v100, %v99
  %v109 = vpack.c.b16 %v102, %v101
  %v110 = vpack.c.b16 %v104, %v103
  %v111 = vpack.c.b16 %v106, %v105
  %v112 = vpack.c.b16 %v107, %v107
  %vm117 = vcmask 588800
  %v119 = vsel %vm117, %v82, 0
  %v122 = vsel %vm117, %v83, 0
  %v125 = vsel %vm117, %v84, 0
  %v128 = vsel %vm117, %v85, 0
  %v131 = vsel %vm117, %v86, 0
  %v134 = vsel %vm117, %v87, 0
  %v137 = vsel %vm117, %v88, 0
  %v140 = vsel %vm117, %v89, 0
  %vm142 = vcmask 1043456
  %v144 = vsel %vm142, %v112, 0
  %146 = vmatprep.subr.bf16.mxu0 0
  %147 = vmatpush1.bf16.msra.mxu0 %v108
  %148 = vmatprep.subr.bf16.mxu0 0
  %149 = vmatpush1.bf16.msra.mxu0 %v109
  %150 = vmatprep.subr.bf16.mxu0 0
  %151 = vmatpush1.bf16.msra.mxu0 %v110
  %152 = vmatprep.subr.bf16.mxu0 0
  %153 = vmatpush1.bf16.msra.mxu0 %v111
  %154 = vmatprep.subr.bf16.mxu0 0
  %155 = vmatpush1.bf16.msra.mxu0 %v144
  %156 = vmatprep.subr.bf16.mxu0 0
  %157 = vmatpush1.bf16.msra.mxu0 0
  %158 = vmatprep.subr.bf16.mxu0 0
  %159 = vmatpush1.bf16.msra.mxu0 0
  %160 = vmatprep.subr.bf16.mxu0 0
  %161 = vmatpush1.bf16.msra.mxu0 0
  %162 = vmatprep.subr.bf16.mxu0 0
  %163 = vmatpush1.bf16.msra.mxu0 0
  %164 = vmatprep.subr.bf16.mxu0 0
  %165 = vmatpush1.bf16.msra.mxu0 0
  %166 = vmatprep.subr.bf16.mxu0 0
  %167 = vmatpush1.bf16.msra.mxu0 0
  %168 = vmatprep.subr.bf16.mxu0 0
  %169 = vmatpush1.bf16.msra.mxu0 0
  %170 = vmatprep.subr.bf16.mxu0 0
  %171 = vmatpush1.bf16.msra.mxu0 0
  %172 = vmatprep.subr.bf16.mxu0 0
  %173 = vmatpush1.bf16.msra.mxu0 0
  %174 = vmatprep.subr.bf16.mxu0 0
  %175 = vmatpush1.bf16.msra.mxu0 0
  %176 = vmatprep.subr.bf16.mxu0 0
  %177 = vmatpush1.bf16.msra.mxu0 0
  %178 = vmatprep.mubr.bf16.mxu0 0
  %179 = vmatmul.mubr.bf16.gmra.mrb[0].mxu0 %v119
  %v180 = vpop.f32.mrb[0].mxu0
  %v181 = vadd.f32 %v48, %v180
  %v182 = vpop.f32.mrb[0].mxu0
  %v183 = vpop.f32.mrb[0].mxu0
  %v184 = vadd.f32 %v48, %v183
  %v185 = vpop.f32.mrb[0].mxu0
  %186 = vmatprep.mubr.bf16.mxu0 0
  %187 = vmatmul.mubr.bf16.gmra.mrb[0].mxu0 %v122
  %v188 = vpop.f32.mrb[0].mxu0
  %v189 = vadd.f32 %v48, %v188
  %v190 = vpop.f32.mrb[0].mxu0
  %v191 = vpop.f32.mrb[0].mxu0
  %v192 = vadd.f32 %v48, %v191
  %v193 = vpop.f32.mrb[0].mxu0
  %194 = vmatprep.mubr.bf16.mxu0 0
  %195 = vmatmul.mubr.bf16.gmra.mrb[0].mxu0 %v125
  %v196 = vpop.f32.mrb[0].mxu0
  %v197 = vadd.f32 %v48, %v196
  %v198 = vpop.f32.mrb[0].mxu0
  %v199 = vpop.f32.mrb[0].mxu0
  %v200 = vadd.f32 %v48, %v199
  %v201 = vpop.f32.mrb[0].mxu0
  %202 = vmatprep.mubr.bf16.mxu0 0
  %203 = vmatmul.mubr.bf16.gmra.mrb[0].mxu0 %v128
  %v204 = vpop.f32.mrb[0].mxu0
  %v205 = vadd.f32 %v48, %v204
  %v206 = vpop.f32.mrb[0].mxu0
  %v207 = vpop.f32.mrb[0].mxu0
  %v208 = vadd.f32 %v48, %v207
  %v209 = vpop.f32.mrb[0].mxu0
  %210 = vmatprep.mubr.bf16.mxu0 0
  %211 = vmatmul.mubr.bf16.gmra.mrb[0].mxu0 %v131
  %v212 = vpop.f32.mrb[0].mxu0
  %v213 = vadd.f32 %v48, %v212
  %v214 = vpop.f32.mrb[0].mxu0
  %v215 = vpop.f32.mrb[0].mxu0
  %v216 = vadd.f32 %v48, %v215
  %v217 = vpop.f32.mrb[0].mxu0
  %218 = vmatprep.mubr.bf16.mxu0 0
  %219 = vmatmul.mubr.bf16.gmra.mrb[0].mxu0 %v134
  %v220 = vpop.f32.mrb[0].mxu0
  %v221 = vadd.f32 %v48, %v220
  %v222 = vpop.f32.mrb[0].mxu0
  %v223 = vpop.f32.mrb[0].mxu0
  %v224 = vadd.f32 %v48, %v223
  %v225 = vpop.f32.mrb[0].mxu0
  %226 = vmatprep.mubr.bf16.mxu0 0
  %227 = vmatmul.mubr.bf16.gmra.mrb[0].mxu0 %v137
  %v228 = vpop.f32.mrb[0].mxu0
  %v229 = vadd.f32 %v48, %v228
  %v230 = vpop.f32.mrb[0].mxu0
  %v231 = vpop.f32.mrb[0].mxu0
  %v232 = vadd.f32 %v48, %v231
  %v233 = vpop.f32.mrb[0].mxu0
  %234 = vmatprep.mubr.bf16.mxu0 0
  %235 = vmatmul.mubr.bf16.gmra.mrb[0].mxu0 %v140
  %v236 = vpop.f32.mrb[0].mxu0
  %v237 = vadd.f32 %v48, %v236
  %v238 = vpop.f32.mrb[0].mxu0
  %v239 = vpop.f32.mrb[0].mxu0
  %v240 = vadd.f32 %v48, %v239
  %v241 = vpop.f32.mrb[0].mxu0
  %242 = vdwg.mxu0
  %v243 = vld [vmem:[%s3] sm:$0xf]
  %v244 = vld [vmem:[%s3 + $0x4] sm:$0xf]
  %v245 = vld [vmem:[%s3 + $0x8] sm:$0xf]
  %v246 = vld [vmem:[%s3 + $0xc] sm:$0xf]
  %v247 = vld [vmem:[%s3 + $0x10] sm:$0xf]
  %v248 = vld [vmem:[%s3 + $0x14] sm:$0xf]
  %v249 = vld [vmem:[%s3 + $0x18] sm:$0xf]
  %v250 = vld [vmem:[%s3 + $0x1c] sm:$0xf]
  %v251 = vld [vmem:[%s3 + $0x20] sm:$0xf]
  %v252 = vld [vmem:[%s3 + $0x24] sm:$0xf]
  %v253 = vld [vmem:[%s3 + $0x28] sm:$0xf]
  %v254 = vld [vmem:[%s3 + $0x2c] sm:$0xf]
  %v255 = vld [vmem:[%s3 + $0x30] sm:$0xf]
  %v256 = vld [vmem:[%s3 + $0x34] sm:$0xf]
  %v257 = vld [vmem:[%s3 + $0x38] sm:$0xf]
  %v258 = vld [vmem:[%s3 + $0x3c] sm:$0xf]
  %v259 = vunpack.c.l.bf16 %v243
  %v260 = vunpack.c.l.bf16 %v244
  %v261 = vunpack.c.l.bf16 %v245
  %v262 = vunpack.c.l.bf16 %v246
  %v263 = vunpack.c.l.bf16 %v247
  %v264 = vunpack.c.l.bf16 %v248
  %v265 = vunpack.c.l.bf16 %v249
  %v266 = vunpack.c.l.bf16 %v250
  %v267 = vunpack.c.l.bf16 %v251
  %v268 = vunpack.c.l.bf16 %v252
  %v269 = vunpack.c.l.bf16 %v253
  %v270 = vunpack.c.l.bf16 %v254
  %v271 = vunpack.c.l.bf16 %v255
  %v272 = vunpack.c.l.bf16 %v256
  %v273 = vunpack.c.l.bf16 %v257
  %v274 = vunpack.c.l.bf16 %v258
  %v275 = vadd.f32 %v181, %v259
  %v276 = vadd.f32 %v184, %v260
  %v277 = vadd.f32 %v189, %v261
  %v278 = vadd.f32 %v192, %v262
  %v279 = vadd.f32 %v197, %v263
  %v280 = vadd.f32 %v200, %v264
  %v281 = vadd.f32 %v205, %v265
  %v282 = vadd.f32 %v208, %v266
  %v283 = vadd.f32 %v213, %v267
  %v284 = vadd.f32 %v216, %v268
  %v285 = vadd.f32 %v221, %v269
  %v286 = vadd.f32 %v224, %v270
  %v287 = vadd.f32 %v229, %v271
  %v288 = vadd.f32 %v232, %v272
  %v289 = vadd.f32 %v237, %v273
  %v290 = vadd.f32 %v240, %v274
  %v291 = vmax.f32 %v275, 0.0
  %v292 = vmax.f32 %v276, 0.0
  %v293 = vmax.f32 %v277, 0.0
  %v294 = vmax.f32 %v278, 0.0
  %v295 = vmax.f32 %v279, 0.0
  %v296 = vmax.f32 %v280, 0.0
  %v297 = vmax.f32 %v281, 0.0
  %v298 = vmax.f32 %v282, 0.0
  %v299 = vmax.f32 %v283, 0.0
  %v300 = vmax.f32 %v284, 0.0
  %v301 = vmax.f32 %v285, 0.0
  %v302 = vmax.f32 %v286, 0.0
  %v303 = vmax.f32 %v287, 0.0
  %v304 = vmax.f32 %v288, 0.0
  %v305 = vmax.f32 %v289, 0.0
  %v306 = vmax.f32 %v290, 0.0
  %307 = vst [vmem:[%s4] sm:$0xff] %v291
  %308 = vst [vmem:[%s4 + $0x8] sm:$0xff] %v292
  %309 = vst [vmem:[%s4 + $0x10] sm:$0xff] %v293
  %310 = vst [vmem:[%s4 + $0x18] sm:$0xff] %v294
  %311 = vst [vmem:[%s4 + $0x20] sm:$0xff] %v295
  %312 = vst [vmem:[%s4 + $0x28] sm:$0xff] %v296
  %313 = vst [vmem:[%s4 + $0x30] sm:$0xff] %v297
  %314 = vst [vmem:[%s4 + $0x38] sm:$0xff] %v298
  %315 = vst [vmem:[%s4 + $0x40] sm:$0xff] %v299
  %316 = vst [vmem:[%s4 + $0x48] sm:$0xff] %v300
  %317 = vst [vmem:[%s4 + $0x50] sm:$0xff] %v301
  %318 = vst [vmem:[%s4 + $0x58] sm:$0xff] %v302
  %319 = vst [vmem:[%s4 + $0x60] sm:$0xff] %v303
  %320 = vst [vmem:[%s4 + $0x68] sm:$0xff] %v304
  %321 = vst [vmem:[%s4 + $0x70] sm:$0xff] %v305
  %322 = vst [vmem:[%s4 + $0x78] sm:$0xff] %v306
  // Predicated region
  $region18: #{basic_block_forward.3} parent=0 // pred_check
    _
  $region19: #{basic_block_forward.3} parent=0 // pred_check_branch
    %324 = sbr.rel (0) target = $region21
  $region20: #{basic_block_forward.3} parent=0 // pred_region
    _
  $region21: #{basic_block_forward.3} parent=0 // pred_fallthru
    _
  // Predicated region
  $region22: #{basic_block_forward.3} parent=0 // pred_check
    _
  $region23: #{basic_block_forward.3} parent=0 // pred_check_branch
    %326 = sbr.rel (0) target = $region25
  $region24: #{basic_block_forward.3} parent=0 // pred_region
    _
  $region25: #{basic_block_forward.3} parent=0 // pred_fallthru
    _

</llo_original>
